<compile_context>
chip_gen: v5e
topology: v5e:2x2
jax: 0.10.0
libtpu: 0.0.40
codegen_flags: <defaults>
</compile_context>

<pallas_src>
import jax
import jax.numpy as jnp
from jax.experimental import pallas as pl
from jax.experimental.pallas import tpu as pltpu

_LANE = 128


def _cdiv(a, b):
    return -(-a // b)


def _round_up(a, b):
    return _cdiv(a, b) * b


def conv_block_forward(x_nchw, w_oihw, bias, gamma, beta, *, stride, eps=1e-5,
                       tile_hw=2048, vmem_budget_bytes=40 << 20):
    # Conv bias is a per-channel constant added before training-mode BatchNorm:
    # the batch-mean subtraction cancels it exactly and the variance is
    # unchanged, so the forward output is identical without it.
    del bias
    N, Cin, H, W = x_nchw.shape
    Cout, _, K, _ = w_oihw.shape
    pad = (K - 1) // 2                       # = 2 for K=5 (padding=2)
    Ho = (H + 2 * pad - K) // stride + 1
    Wo = (W + 2 * pad - K) // stride + 1
    HWo = Ho * Wo
    M = N * HWo
    K2Cin = K * K * Cin

    # ---- tile size from VMEM budget (double-buffered blocks), then balanced ----
    per_col_p1 = 2 * 2 * (K2Cin + Cout)          # bf16 patches + bf16 y, x2 buffers
    per_col_p2 = 2 * (2 * Cout + 4 * Cout)       # bf16 y in + f32 out, x2 buffers
    per_col = max(per_col_p1, per_col_p2)
    fixed = 2 * 2 * Cout * K2Cin + (512 << 10)   # resident bf16 weights + stats/slack
    budget_cols = ((vmem_budget_bytes - fixed) // per_col) // _LANE * _LANE
    t_cap = max(_LANE, min(tile_hw, budget_cols))
    n_hw = _cdiv(HWo, t_cap)
    T = _round_up(_cdiv(HWo, n_hw), _LANE)       # balanced, lane-dense tile
    n_hw = _cdiv(HWo, T)
    HWo_pad = n_hw * T
    vmem_limit = int(min(48 << 20, max(per_col * T + fixed + (4 << 20), 16 << 20)))

    # ---- im2col: ONE stack of K*K strided NCHW tap slices, in bf16 ----
    xb = x_nchw.astype(jnp.bfloat16)
    xp = jnp.pad(xb, ((0, 0), (0, 0), (pad, pad), (pad, pad)))
    taps = [
        xp[:, :, kh:kh + stride * (Ho - 1) + 1:stride,
               kw:kw + stride * (Wo - 1) + 1:stride]
        for kh in range(K) for kw in range(K)
    ]                                            # K*K views of shape (N, Cin, Ho, Wo)
    patches = jnp.stack(taps, axis=2)            # (N, Cin, K*K, Ho, Wo) single materialization
    patches = patches.reshape(N, K2Cin, HWo)     # feature order = (cin, kh, kw)
    if HWo_pad != HWo:
        patches = jnp.pad(patches, ((0, 0), (0, 0), (0, HWo_pad - HWo)))

    # weights folded with the same (cin, kh, kw) contraction order, bf16
    wmat = w_oihw.reshape(Cout, K2Cin).astype(jnp.bfloat16)

    # ---------------- pass 1: conv matmul + per-tile centered BN partials ----------------
    def conv_stats_kernel(p_ref, w_ref, y_ref, s_ref, m2_ref):
        j = pl.program_id(1)
        p = p_ref[...]                                        # (1, K2Cin, T) bf16
        y = jnp.dot(w_ref[...], p[0],
                    preferred_element_type=jnp.float32)       # (Cout, T) f32 on MXU
        y_ref[...] = y.astype(y_ref.dtype)[None]              # bf16 intermediate
        # BN partials from the f32 accumulator; padded columns are exact zeros
        # (zero patches, no bias) -> they contribute 0 to the sum, and are
        # masked out of the centered second moment.
        valid = jnp.minimum(T, HWo - j * T)
        s = jnp.sum(y, axis=1, keepdims=True)                 # (Cout, 1)
        mean_t = s / valid.astype(jnp.float32)
        col = jax.lax.broadcasted_iota(jnp.int32, (1, T), 1)
        d = jnp.where(col < valid, y - mean_t, 0.0)
        m2 = jnp.sum(d * d, axis=1, keepdims=True)            # (Cout, 1)
        s_ref[...] = jnp.broadcast_to(s.reshape(1, 1, Cout, 1), s_ref.shape)
        m2_ref[...] = jnp.broadcast_to(m2.reshape(1, 1, Cout, 1), m2_ref.shape)

    y, s_part, m2_part = pl.pallas_call(
        conv_stats_kernel,
        out_shape=(
            jax.ShapeDtypeStruct((N, Cout, HWo_pad), jnp.bfloat16),
            jax.ShapeDtypeStruct((N, n_hw, Cout, _LANE), jnp.float32),
            jax.ShapeDtypeStruct((N, n_hw, Cout, _LANE), jnp.float32),
        ),
        grid_spec=pltpu.PrefetchScalarGridSpec(
            num_scalar_prefetch=0,
            grid=(N, n_hw),
            in_specs=[
                pl.BlockSpec((1, K2Cin, T), lambda n, j: (n, 0, j)),   # patches tile
                pl.BlockSpec((Cout, K2Cin), lambda n, j: (0, 0)),      # weights (resident)
            ],
            out_specs=[
                pl.BlockSpec((1, Cout, T), lambda n, j: (n, 0, j)),        # pre-BN conv out
                pl.BlockSpec((1, 1, Cout, _LANE), lambda n, j: (n, j, 0, 0)),  # tile sum
                pl.BlockSpec((1, 1, Cout, _LANE), lambda n, j: (n, j, 0, 0)),  # tile M2
            ],
        ),
        compiler_params=pltpu.CompilerParams(
            dimension_semantics=("parallel", "parallel"),
            vmem_limit_bytes=vmem_limit),
    )(patches, wmat)

    # ---- tiny exact cross-tile merge of (count, sum, M2) — Chan/Welford ----
    valid_cnt = jnp.minimum(T, HWo - jnp.arange(n_hw) * T).astype(jnp.float32)  # (n_hw,)
    s = s_part[..., 0]                                   # (N, n_hw, Cout)
    m2 = m2_part[..., 0]
    mean = jnp.sum(s, axis=(0, 1)) / M                   # (Cout,)
    mean_t = s / valid_cnt[None, :, None]
    var = (jnp.sum(m2, axis=(0, 1))
           + jnp.sum(valid_cnt[None, :, None] * jnp.square(mean_t - mean[None, None, :]),
                     axis=(0, 1))) / M
    var = jnp.maximum(var, 0.0)                          # guard against f32 round-off
    scale = gamma.astype(jnp.float32) * jax.lax.rsqrt(var + eps)
    shift = beta.astype(jnp.float32) - mean * scale

    # ---------------- pass 2: fused BN affine + ELU, written in final layout ----------------
    def bn_elu_kernel(y_ref, scale_ref, shift_ref, o_ref):
        z = (y_ref[...].astype(jnp.float32) * scale_ref[...][None]
             + shift_ref[...][None])
        o_ref[...] = jnp.where(z > 0, z, jnp.expm1(jnp.minimum(z, 0.0)))

    out_pad = pl.pallas_call(
        bn_elu_kernel,
        out_shape=jax.ShapeDtypeStruct((N, Cout, HWo_pad), jnp.float32),
        grid_spec=pltpu.PrefetchScalarGridSpec(
            num_scalar_prefetch=0,
            grid=(N, n_hw),
            in_specs=[
                pl.BlockSpec((1, Cout, T), lambda n, j: (n, 0, j)),
                pl.BlockSpec((Cout, 1), lambda n, j: (0, 0)),
                pl.BlockSpec((Cout, 1), lambda n, j: (0, 0)),
            ],
            out_specs=pl.BlockSpec((1, Cout, T), lambda n, j: (n, 0, j)),
        ),
        compiler_params=pltpu.CompilerParams(
            dimension_semantics=("parallel", "parallel"),
            vmem_limit_bytes=vmem_limit),
    )(y, scale.reshape(Cout, 1), shift.reshape(Cout, 1))

    out = out_pad[:, :, :HWo] if HWo_pad != HWo else out_pad
    return out.reshape(N, Cout, Ho, Wo)                  # already NCHW: no transpose


def conv_block_reference(x, w, b, gamma, beta, *, stride, eps=1e-5):
    """Pure-JAX f32 reference with identical semantics (for correctness check)."""
    y = jax.lax.conv_general_dilated(
        x, w, window_strides=(stride, stride), padding=((2, 2), (2, 2)),
        dimension_numbers=("NCHW", "OIHW", "NCHW"))
    y = y + b.reshape(1, -1, 1, 1)
    mean = jnp.mean(y, axis=(0, 2, 3), keepdims=True)
    var = jnp.mean(jnp.square(y - mean), axis=(0, 2, 3), keepdims=True)
    z = (y - mean) * jax.lax.rsqrt(var + eps)
    z = z * gamma.reshape(1, -1, 1, 1) + beta.reshape(1, -1, 1, 1)
    return jnp.where(z > 0, z, jnp.expm1(jnp.minimum(z, 0.0)))


if __name__ == "__main__":
    # small shapes consistent with conv_block(ch_in=4, ch_out=8, stride=2)
    N, Cin, H, W = 2, 4, 16, 16
    Cout, K, stride = 8, 5, 2

    key = jax.random.PRNGKey(0)
    kx, kw, kb = jax.random.split(key, 3)
    x = jax.random.normal(kx, (N, Cin, H, W), jnp.float32)
    w = jax.random.normal(kw, (Cout, Cin, K, K), jnp.float32) * 0.1   # Conv2d.weight
    b = jax.random.normal(kb, (Cout,), jnp.float32) * 0.1             # Conv2d.bias
    gamma = jnp.ones((Cout,), jnp.float32)                            # BatchNorm2d.weight
    beta = jnp.zeros((Cout,), jnp.float32)                            # BatchNorm2d.bias
    # TODO(synk): BatchNorm2d running_mean/var momentum updates are a training-time
    # buffer side effect, not part of the forward output tensor, so not replicated.

    out = jax.block_until_ready(conv_block_forward(x, w, b, gamma, beta, stride=stride))

    ref = conv_block_reference(x, w, b, gamma, beta, stride=stride)
    Ho = (H + 4 - K) // stride + 1
    assert out.shape == (N, Cout, Ho, Ho), out.shape
    err = float(jnp.max(jnp.abs(out - ref)))
    # bf16 patches/weights/intermediate with f32 accumulation -> loosened tolerance
    assert jnp.allclose(out, ref, atol=3e-2, rtol=3e-2), f"max abs err = {err}"

    print("KERNEL_OK")
</pallas_src>

<mosaic_0001>
module attributes {stable_mosaic.version = 11 : i64} {
  func.func @conv_stats_kernel(%arg0: i32, %arg1: i32, %arg2: memref<1x100x128xbf16, #tpu.memory_space<vmem>>, %arg3: memref<8x100xbf16, #tpu.memory_space<vmem>>, %arg4: memref<1x8x128xbf16, #tpu.memory_space<vmem>>, %arg5: memref<1x1x8x128xf32, #tpu.memory_space<vmem>>, %arg6: memref<1x1x8x128xf32, #tpu.memory_space<vmem>>) attributes {dimension_semantics = [#tpu.dimension_semantics<parallel>, #tpu.dimension_semantics<parallel>], iteration_bounds = array<i64: 2, 1>, scalar_prefetch = 0 : i64, scratch_operands = 0 : i64, tpu.core_type = #tpu.core_type<tc>, window_params = [{transform_indices = @transform_0, window_bounds = array<i64: 1, 100, 128>}, {pipeline_mode = #tpu.pipeline_mode<synchronous>, transform_indices = @transform_1, window_bounds = array<i64: 8, 100>}, {transform_indices = @transform_2, window_bounds = array<i64: 1, 8, 128>}, {transform_indices = @transform_3, window_bounds = array<i64: 1, 1, 8, 128>}, {transform_indices = @transform_4, window_bounds = array<i64: 1, 1, 8, 128>}]} {
    %c0 = arith.constant 0 : index
    %c0_0 = arith.constant 0 : index
    %c0_1 = arith.constant 0 : index
    %0 = vector.load %arg2[%c0, %c0_0, %c0_1] : memref<1x100x128xbf16, #tpu.memory_space<vmem>>, vector<1x100x128xbf16>
    %c0_2 = arith.constant 0 : index
    %c0_3 = arith.constant 0 : index
    %1 = vector.load %arg3[%c0_2, %c0_3] : memref<8x100xbf16, #tpu.memory_space<vmem>>, vector<8x100xbf16>
    %2 = vector.shape_cast %0 : vector<1x100x128xbf16> to vector<100x128xbf16>
    %cst = arith.constant dense<0.000000e+00> : vector<8x128xf32>
    %3 = tpu.matmul %1, %2, %cst {dimension_numbers = #tpu.dot_dimension_numbers<[1], [0], [0], [1], [0, 0, 1, 1], [], []>} : vector<8x100xbf16>, vector<100x128xbf16>, vector<8x128xf32> -> vector<8x128xf32>
    %4 = arith.truncf %3 : vector<8x128xf32> to vector<8x128xbf16>
    %5 = vector.shape_cast %4 : vector<8x128xbf16> to vector<1x8x128xbf16>
    %c0_4 = arith.constant 0 : index
    %c0_5 = arith.constant 0 : index
    %c0_6 = arith.constant 0 : index
    %6 = vector.load %arg4[%c0_4, %c0_5, %c0_6] : memref<1x8x128xbf16, #tpu.memory_space<vmem>>, vector<1x8x128xbf16>
    tpu.vector_store %arg4[%c0_4, %c0_5, %c0_6], %5 {strides = array<i32>} : memref<1x8x128xbf16, #tpu.memory_space<vmem>>, vector<1x8x128xbf16>,
    %c128_i32 = arith.constant 128 : i32
    %7 = arith.muli %arg1, %c128_i32 : i32
    %c64_i32 = arith.constant 64 : i32
    %8 = arith.subi %c64_i32, %7 : i32
    %c128_i32_7 = arith.constant 128 : i32
    %9 = arith.minsi %c128_i32_7, %8 : i32
    %cst_8 = arith.constant dense<0.000000e+00> : vector<8xf32>
    %10 = vector.multi_reduction <add>, %3, %cst_8 [1] : vector<8x128xf32> to vector<8xf32>
    %11 = vector.shape_cast %10 : vector<8xf32> to vector<8x1xf32>
    %12 = arith.sitofp %9 : i32 to f32
    %13 = vector.broadcast %12 : f32 to vector<8x1xf32>
    %14 = arith.divf %11, %13 : vector<8x1xf32>
    %15 = tpu.iota {dimensions = array<i32: 1>} : vector<1x128xi32>
    %16 = vector.broadcast %9 : i32 to vector<1x128xi32>
    %17 = arith.cmpi slt, %15, %16 : vector<1x128xi32>
    %18 = vector.broadcast %14 : vector<8x1xf32> to vector<8x128xf32>
    %19 = arith.subf %3, %18 : vector<8x128xf32>
    %cst_9 = arith.constant 0.000000e+00 : f32
    %20 = vector.shape_cast %17 : vector<1x128xi1> to vector<1x128xi1>
    %21 = vector.broadcast %20 : vector<1x128xi1> to vector<8x128xi1>
    %22 = vector.broadcast %cst_9 : f32 to vector<8x128xf32>
    %23 = arith.select %21, %19, %22 : vector<8x128xi1>, vector<8x128xf32>
    %24 = arith.mulf %23, %23 : vector<8x128xf32>
    %cst_10 = arith.constant dense<0.000000e+00> : vector<8xf32>
    %25 = vector.multi_reduction <add>, %24, %cst_10 [1] : vector<8x128xf32> to vector<8xf32>
    %26 = vector.shape_cast %25 : vector<8xf32> to vector<8x1xf32>
    %27 = vector.shape_cast %11 : vector<8x1xf32> to vector<1x1x8x1xf32>
    %28 = vector.shape_cast %27 : vector<1x1x8x1xf32> to vector<1x1x8x1xf32>
    %29 = vector.broadcast %28 : vector<1x1x8x1xf32> to vector<1x1x8x128xf32>
    %c0_11 = arith.constant 0 : index
    %c0_12 = arith.constant 0 : index
    %c0_13 = arith.constant 0 : index
    %c0_14 = arith.constant 0 : index
    %30 = vector.load %arg5[%c0_11, %c0_12, %c0_13, %c0_14] : memref<1x1x8x128xf32, #tpu.memory_space<vmem>>, vector<1x1x8x128xf32>
    tpu.vector_store %arg5[%c0_11, %c0_12, %c0_13, %c0_14], %29 {strides = array<i32>} : memref<1x1x8x128xf32, #tpu.memory_space<vmem>>, vector<1x1x8x128xf32>,
    %31 = vector.shape_cast %26 : vector<8x1xf32> to vector<1x1x8x1xf32>
    %32 = vector.shape_cast %31 : vector<1x1x8x1xf32> to vector<1x1x8x1xf32>
    %33 = vector.broadcast %32 : vector<1x1x8x1xf32> to vector<1x1x8x128xf32>
    %c0_15 = arith.constant 0 : index
    %c0_16 = arith.constant 0 : index
    %c0_17 = arith.constant 0 : index
    %c0_18 = arith.constant 0 : index
    %34 = vector.load %arg6[%c0_15, %c0_16, %c0_17, %c0_18] : memref<1x1x8x128xf32, #tpu.memory_space<vmem>>, vector<1x1x8x128xf32>
    tpu.vector_store %arg6[%c0_15, %c0_16, %c0_17, %c0_18], %33 {strides = array<i32>} : memref<1x1x8x128xf32, #tpu.memory_space<vmem>>, vector<1x1x8x128xf32>,
    return
  }
  func.func @transform_0(%arg0: i32, %arg1: i32) -> (i32, i32, i32) {
    %c0_i32 = arith.constant 0 : i32
    %c0_i32_0 = arith.constant 0 : i32
    return %arg0, %c0_i32, %arg1 : i32, i32, i32
  }
  func.func @transform_1(%arg0: i32, %arg1: i32) -> (i32, i32) {
    %c0_i32 = arith.constant 0 : i32
    %c0_i32_0 = arith.constant 0 : i32
    %c0_i32_1 = arith.constant 0 : i32
    return %c0_i32, %c0_i32_0 : i32, i32
  }
  func.func @transform_2(%arg0: i32, %arg1: i32) -> (i32, i32, i32) {
    %c0_i32 = arith.constant 0 : i32
    %c0_i32_0 = arith.constant 0 : i32
    return %arg0, %c0_i32, %arg1 : i32, i32, i32
  }
  func.func @transform_3(%arg0: i32, %arg1: i32) -> (i32, i32, i32, i32) {
    %c0_i32 = arith.constant 0 : i32
    %c0_i32_0 = arith.constant 0 : i32
    %c0_i32_1 = arith.constant 0 : i32
    return %arg0, %arg1, %c0_i32, %c0_i32_0 : i32, i32, i32, i32
  }
  func.func @transform_4(%arg0: i32, %arg1: i32) -> (i32, i32, i32, i32) {
    %c0_i32 = arith.constant 0 : i32
    %c0_i32_0 = arith.constant 0 : i32
    %c0_i32_1 = arith.constant 0 : i32
    return %arg0, %arg1, %c0_i32, %c0_i32_0 : i32, i32, i32, i32
  }
}

</mosaic_0001>

<llo_original>
// kernel: tpu_custom_call.1
$region0: #{tpu_custom_call.1}
  #allocation0 [shape = 'u32[]', space=smem, size = 0x4, offset = 0x4, fixed_abs, tag = 'smem constant byte address 0x4 - core index']
  #allocation1 [shape = 'u32[72,128]{1,0:T(1,128)}', space=vmem, size = 0x9000, scoped, tag = 'internal scratch']
  %s0 = inlined_call_operand.vmem [shape: bf16[2,100,128], index: 0, kind: input, shape index: {}]
  %s1 = inlined_call_operand.vmem [shape: bf16[8,100], index: 1, kind: input, shape index: {}]
  %s2 = inlined_call_operand.hbm [shape: bf16[2,8,128], index: 2, kind: output, shape index: {0}]
  %s3 = inlined_call_operand.hbm [shape: f32[2,1,8,128], index: 3, kind: output, shape index: {1}]
  %s4 = inlined_call_operand.hbm [shape: f32[2,1,8,128], index: 4, kind: output, shape index: {2}]
  %5 = xla_tuple %s2, %s3, %s4
  %s6 = sld [smem:[#allocation0]]
  $region57: #{tpu_custom_call.1} parent=0
    _
  %s8 = ssub.s32 1, %s6
  %s9 = scalar_select 0, %s8, %s6
  $region1: #{tpu_custom_call.1} parent=0
    #allocation2 [shape = 'u8[4096]{0}', space=vmem, size = 0x1000, scoped, tag = 'output window, operand 0']
    #allocation3 [shape = 's32[2]{0}', space=sflag, size = 0x8, scoped, tag = 'scoped memory for tpu_custom_call.1']
    #allocation4 [shape = 'u8[8192]{0}', space=vmem, size = 0x2000, scoped, tag = 'output window, operand 1']
    #allocation5 [shape = 's32[2]{0}', space=sflag, size = 0x8, scoped, tag = 'scoped memory for tpu_custom_call.1']
    #allocation6 [shape = 'u8[8192]{0}', space=vmem, size = 0x2000, scoped, tag = 'output window, operand 2']
    %10 = vsyncpa [#allocation3], 0
    %s11 = scalar_lea.sflag [#allocation3], 1
    %12 = vsyncpa %s11, 0
    %13 = vsyncpa [#allocation5], 0
    %s14 = scalar_lea.sflag [#allocation5], 1
    %15 = vsyncpa %s14, 0
    loop: start=0, step=1, limit=4
    $region2: #{tpu_custom_call.1} parent=1 // loop_pre_header
      _
    $region3: #{tpu_custom_call.1} parent=1 // loop_header
      %s17 = sphi 0, %s21
      %p18 = scmp.ge.s32.totalorder %s17, 4
      %s24 = sphi 0, %s36
      %s25 = sphi 0, %s32
      %s26 = sphi 0, %s24
      %s27 = sphi 0, %s25
      %s28 = sphi 0, %s26
      %s29 = sphi 0, %s27
      %s41 = sphi 0, %s43
      %s44 = sphi 0, %s41
      %s45 = sphi 0, %s44
      %s61 = sphi 0, %s45
      %s65 = sphi 0, %s65
      %s67 = sphi 0, %s65
      %s68 = sphi 0, %s67
      %s82 = sphi 0, %s68
      %s90 = sphi 0, %s92
      %s93 = sphi 0, %s90
      %s94 = sphi 0, %s93
      %s110 = sphi 0, %s94
      %s118 = sphi 0, %s120
      %s121 = sphi 0, %s118
      %s122 = sphi 0, %s121
      %s138 = sphi 0, %s122
      %s146 = sphi 0, %s148
      %s149 = sphi 0, %s146
      %s150 = sphi 0, %s149
      %s166 = sphi 0, %s150
    $region4: #{tpu_custom_call.1} parent=1 // loop_header_branch
      %20 = sbr.rel (%p18) target = $region8
    $region5: #{tpu_custom_call.1} parent=1 // loop_body
      %s22 = ssub.s32 %s17, 1
      %s23 = ssub.s32 %s17, 2
      %s30 = sadd.s32 1, %s25
      %p31 = scmp.ge.s32.totalorder %s30, 1
      %s32 = scalar_select %p31, 0, %s30
      %s33 = sadd.s32 1, %s24
      %s34 = scalar_select %p31, %s33, %s24
      %p35 = scmp.ge.s32.totalorder %s34, 2
      %s36 = scalar_select %p35, 0, %s34
      %s37 = ssub.s32 %s24, %s36
      %s38 = ssub.s32 %s25, %s32
      %s39 = sor.u32 %s37, %s38
      %p40 = scmp.eq.s32.totalorder %s39, 0
      %s42 = sadd.s32 %s41, 1
      %s43 = scalar_select %p40, %s41, %s42
      %p46 = pneg %p40
      %p47 = scmp.eq.s32.totalorder %s17, 1
      %p48 = por %p46, %p47
      %p49 = scmp.ne.s32.totalorder %s41, %s44
      %p50 = scmp.eq.s32.totalorder %s17, 0
      %p51 = por %p49, %p50
      %p52 = scmp.ne.s32.totalorder %s41, %s44
      %p53 = scmp.eq.s32.totalorder %s22, 1
      %p54 = por %p52, %p53
      %p55 = scmp.ne.s32.totalorder %s44, %s45
      %p56 = scmp.eq.s32.totalorder %s22, 0
      %p57 = por %p55, %p56
      %p58 = scmp.ne.s32.totalorder %s44, %s45
      %p59 = scmp.eq.s32.totalorder %s23, 1
      %p60 = por %p58, %p59
      %p62 = scmp.ne.s32.totalorder %s45, %s61
      %p63 = scmp.eq.s32.totalorder %s23, 0
      %p64 = por %p62, %p63
      %s66 = sadd.s32 %s65, 1
      %p69 = scmp.eq.s32.totalorder %s17, 1
      %p70 = scmp.ne.s32.totalorder %s65, %s67
      %p71 = scmp.eq.s32.totalorder %s17, 0
      %p72 = por %p70, %p71
      %p73 = scmp.ne.s32.totalorder %s65, %s67
      %p74 = scmp.eq.s32.totalorder %s22, 1
      %p75 = por %p73, %p74
      %p76 = scmp.ne.s32.totalorder %s67, %s68
      %p77 = scmp.eq.s32.totalorder %s22, 0
      %p78 = por %p76, %p77
      %p79 = scmp.ne.s32.totalorder %s67, %s68
      %p80 = scmp.eq.s32.totalorder %s23, 1
      %p81 = por %p79, %p80
      %p83 = scmp.ne.s32.totalorder %s68, %s82
      %p84 = scmp.eq.s32.totalorder %s23, 0
      %p85 = por %p83, %p84
      %s86 = ssub.s32 %s24, %s36
      %s87 = ssub.s32 %s25, %s32
      %s88 = sor.u32 %s86, %s87
      %p89 = scmp.eq.s32.totalorder %s88, 0
      %s91 = sadd.s32 %s90, 1
      %s92 = scalar_select %p89, %s90, %s91
      %p95 = pneg %p89
      %p96 = scmp.eq.s32.totalorder %s17, 1
      %p97 = por %p95, %p96
      %p98 = scmp.ne.s32.totalorder %s90, %s93
      %p99 = scmp.eq.s32.totalorder %s17, 0
      %p100 = por %p98, %p99
      %p101 = scmp.ne.s32.totalorder %s90, %s93
      %p102 = scmp.eq.s32.totalorder %s22, 1
      %p103 = por %p101, %p102
      %p104 = scmp.ne.s32.totalorder %s93, %s94
      %p105 = scmp.eq.s32.totalorder %s22, 0
      %p106 = por %p104, %p105
      %p107 = scmp.ne.s32.totalorder %s93, %s94
      %p108 = scmp.eq.s32.totalorder %s23, 1
      %p109 = por %p107, %p108
      %p111 = scmp.ne.s32.totalorder %s94, %s110
      %p112 = scmp.eq.s32.totalorder %s23, 0
      %p113 = por %p111, %p112
      %s114 = ssub.s32 %s24, %s36
      %s115 = ssub.s32 %s25, %s32
      %s116 = sor.u32 %s114, %s115
      %p117 = scmp.eq.s32.totalorder %s116, 0
      %s119 = sadd.s32 %s118, 1
      %s120 = scalar_select %p117, %s118, %s119
      %p123 = pneg %p117
      %p124 = scmp.eq.s32.totalorder %s17, 1
      %p125 = por %p123, %p124
      %p126 = scmp.ne.s32.totalorder %s118, %s121
      %p127 = scmp.eq.s32.totalorder %s17, 0
      %p128 = por %p126, %p127
      %p129 = scmp.ne.s32.totalorder %s118, %s121
      %p130 = scmp.eq.s32.totalorder %s22, 1
      %p131 = por %p129, %p130
      %p132 = scmp.ne.s32.totalorder %s121, %s122
      %p133 = scmp.eq.s32.totalorder %s22, 0
      %p134 = por %p132, %p133
      %p135 = scmp.ne.s32.totalorder %s121, %s122
      %p136 = scmp.eq.s32.totalorder %s23, 1
      %p137 = por %p135, %p136
      %p139 = scmp.ne.s32.totalorder %s122, %s138
      %p140 = scmp.eq.s32.totalorder %s23, 0
      %p141 = por %p139, %p140
      %s142 = ssub.s32 %s24, %s36
      %s143 = ssub.s32 %s25, %s32
      %s144 = sor.u32 %s142, %s143
      %p145 = scmp.eq.s32.totalorder %s144, 0
      %s147 = sadd.s32 %s146, 1
      %s148 = scalar_select %p145, %s146, %s147
      %p151 = pneg %p145
      %p152 = scmp.eq.s32.totalorder %s17, 1
      %p153 = por %p151, %p152
      %p154 = scmp.ne.s32.totalorder %s146, %s149
      %p155 = scmp.eq.s32.totalorder %s17, 0
      %p156 = por %p154, %p155
      %p157 = scmp.ne.s32.totalorder %s146, %s149
      %p158 = scmp.eq.s32.totalorder %s22, 1
      %p159 = por %p157, %p158
      %p160 = scmp.ne.s32.totalorder %s149, %s150
      %p161 = scmp.eq.s32.totalorder %s22, 0
      %p162 = por %p160, %p161
      %p163 = scmp.ne.s32.totalorder %s149, %s150
      %p164 = scmp.eq.s32.totalorder %s23, 1
      %p165 = por %p163, %p164
      %p167 = scmp.ne.s32.totalorder %s150, %s166
      %p168 = scmp.eq.s32.totalorder %s23, 0
      %p169 = por %p167, %p168
      %p170 = scmp.le.s32.totalorder 1, %s17
      %p171 = scmp.lt.s32.totalorder %s17, 3
      %p172 = pnand %p170, %p171
      %p173 = pneg %p172
      // Predicated region
      $region9: #{tpu_custom_call.1} parent=5 // pred_check
        _
      $region10: #{tpu_custom_call.1} parent=5 // pred_check_branch
        %175 = sbr.rel (%p172) target = $region12
      $region11: #{tpu_custom_call.1} parent=5 // pred_region
        %s176 = ssub.s32 %s17, 1
        // Predicated region
        $region13: #{tpu_custom_call.1} parent=11 // pred_check
          %p177 = pneg %p78
        $region14: #{tpu_custom_call.1} parent=11 // pred_check_branch
          %179 = sbr.rel (%p177) target = $region16
        $region15: #{tpu_custom_call.1} parent=11 // pred_region
          _
        $region16: #{tpu_custom_call.1} parent=11 // pred_fallthru
          _
      $region12: #{tpu_custom_call.1} parent=5 // pred_fallthru
        _
      %p180 = scmp.lt.s32.totalorder %s17, 2
      // Predicated region
      $region17: #{tpu_custom_call.1} parent=5 // pred_check
        %p181 = pneg %p180
      $region18: #{tpu_custom_call.1} parent=5 // pred_check_branch
        %183 = sbr.rel (%p181) target = $region20
      $region19: #{tpu_custom_call.1} parent=5 // pred_region
        // Predicated region
        $region21: #{tpu_custom_call.1} parent=19 // pred_check
          %p184 = pneg %p51
        $region22: #{tpu_custom_call.1} parent=19 // pred_check_branch
          %186 = sbr.rel (%p184) target = $region24
        $region23: #{tpu_custom_call.1} parent=19 // pred_region
          %p187 = scmp.lt.s32.totalorder %s24, 1
          %s188 = scalar_select %p187, %s24, 1
          %p189 = scmp.lt.s32.totalorder %s25, 0
          %s190 = scalar_select %p189, %s25, 0
          %s191 = smul.addr %s188, 13
          %s192 = sadd.s32 %s190, %s191
          %s193 = smul.addr %s192, 4
          %s194 = scalar_lea.vmem %s0, %s193
        $region24: #{tpu_custom_call.1} parent=19 // pred_fallthru
          _
      $region20: #{tpu_custom_call.1} parent=5 // pred_fallthru
        _
      %p195 = scmp.le.s32.totalorder 1, %s17
      %p196 = scmp.lt.s32.totalorder %s17, 3
      %p197 = pnand %p195, %p196
      %p198 = pneg %p197
      // Predicated region
      $region25: #{tpu_custom_call.1} parent=5 // pred_check
        _
      $region26: #{tpu_custom_call.1} parent=5 // pred_check_branch
        %200 = sbr.rel (%p197) target = $region28
      $region27: #{tpu_custom_call.1} parent=5 // pred_region
        %s201 = ssub.s32 %s17, 1
        %p202 = scmp.lt.s32.totalorder %s26, 1
        %s203 = scalar_select %p202, %s26, 1
        %p204 = scmp.lt.s32.totalorder %s27, 0
        %s205 = scalar_select %p204, %s27, 0
        %s206 = smul.addr %s203, 13
        %s207 = sadd.s32 %s205, %s206
        %s208 = smul.addr %s207, 4
        %s209 = scalar_lea.vmem %s0, %s208
        %p210 = pneg %p57
        %p211 = pneg %p54
        %p212 = pneg %p78
        %p213 = pneg %p75
        %p214 = pneg %p106
        %p215 = pneg %p103
        %s216 = sand.u32 %s93, 1
        %s217 = scalar_lea.sflag [#allocation3], %s216
        %s218 = sand.u32 %s93, 1
        %s219 = smul.addr %s218, 4
        %s220 = scalar_lea.vmem [#allocation2], %s219
        %p221 = pneg %p134
        %p222 = pneg %p131
        %s223 = sand.u32 %s22, 1
        %s224 = scalar_lea.sflag [#allocation5], %s223
        %s225 = sand.u32 %s121, 1
        %s226 = smul.addr %s225, 8
        %s227 = scalar_lea.vmem [#allocation4], %s226
        %p228 = pneg %p162
        %p229 = pneg %p159
        %s230 = sand.u32 %s22, 1
        %s231 = scalar_lea.sflag [#allocation5], %s230
        %s232 = sand.u32 %s149, 1
        %s233 = smul.addr %s232, 8
        %s234 = scalar_lea.vmem [#allocation6], %s233
        %p235 = scmp.lt.s32.totalorder %s26, 1
        %s236 = scalar_select %p235, %s26, 1
        %p237 = scmp.lt.s32.totalorder %s27, 0
        %s238 = scalar_select %p237, %s27, 0
        %s239 = smul.addr %s236, 13
        %s240 = sadd.s32 %s238, %s239
        %s241 = smul.addr %s240, 4
        %s242 = scalar_lea.vmem %s0, %s241
        %v244 = vld [vmem:[%s242] sm:$0xf]
        %v245 = vld [vmem:[%s242 + $0x4] sm:$0xf]
        %v246 = vld [vmem:[%s242 + $0x8] sm:$0xf]
        %v247 = vld [vmem:[%s242 + $0xc] sm:$0xf]
        %v248 = vld [vmem:[%s242 + $0x10] sm:$0xf]
        %v249 = vld [vmem:[%s242 + $0x14] sm:$0xf]
        %v250 = vld [vmem:[%s242 + $0x18] sm:$0xf]
        %v251 = vld [vmem:[%s242 + $0x1c] sm:$0xf]
        %v252 = vld [vmem:[%s242 + $0x20] sm:$0xf]
        %v253 = vld [vmem:[%s242 + $0x24] sm:$0xf]
        %v254 = vld [vmem:[%s242 + $0x28] sm:$0xf]
        %v255 = vld [vmem:[%s242 + $0x2c] sm:$0xf]
        %v256 = vld [vmem:[%s242 + $0x30] sm:$0x3]
        %v257 = vld [vmem:[%s1] sm:$0xf]
        %v271 = vunpack.c.l.b16 %v244
        %v272 = vunpack.c.l.b16 %v245
        %v273 = vunpack.c.l.b16 %v246
        %v274 = vunpack.c.l.b16 %v247
        %v275 = vunpack.c.l.b16 %v248
        %v276 = vunpack.c.l.b16 %v249
        %v277 = vunpack.c.l.b16 %v250
        %v278 = vunpack.c.l.b16 %v251
        %v279 = vunpack.c.l.b16 %v252
        %v280 = vunpack.c.l.b16 %v253
        %v281 = vunpack.c.l.b16 %v254
        %v282 = vunpack.c.l.b16 %v255
        %v283 = vunpack.c.l.b16 %v256
        %v284 = vpack.c.b16 %v272, %v271
        %v285 = vpack.c.b16 %v274, %v273
        %v286 = vpack.c.b16 %v276, %v275
        %v287 = vpack.c.b16 %v278, %v277
        %v288 = vpack.c.b16 %v280, %v279
        %v289 = vpack.c.b16 %v282, %v281
        %v290 = vpack.c.b16 %v283, %v283
        %vm297 = vcmask 818176
        %v299 = vsel %vm297, %v257, 0
        %vm301 = vcmask 1041408
        %v303 = vsel %vm301, %v290, 0
        %305 = vmatpush.bf16.msra.mxu0 0
        %306 = vmatpush.bf16.msra.mxu0 %v303
        %307 = vmatpush.bf16.msra.mxu0 %v289
        %308 = vmatpush.bf16.msra.mxu0 %v288
        %309 = vmatpush.bf16.msra.mxu0 %v287
        %310 = vmatpush.bf16.msra.mxu0 %v286
        %311 = vmatpush.bf16.msra.mxu0 %v285
        %312 = vmatpush.bf16.msra.mxu0 %v284
        %313 = vmatmul.bf16.gmra.mxu0 %v299
        %v314 = vpop.f32.mrf.mxu0
        %v315 = vadd.f32 0.0, %v314
        %v316 = vpop.f32.mrf.mxu0
        %317 = vdwg.mxu0
        %v318 = vpack.c.bf16 %v315, %v315
        %319 = vst [vmem:[%s220] sm:$0xf] %v318
        %s320 = smul.u32 %s27, 128
        %s321 = ssub.s32 64, %s320
        %p322 = scmp.lt.s32.totalorder %s321, 128
        %s323 = scalar_select %p322, %s321, 128
        %324 = vadd.xlane.f32.xlu0 %v315
        %v325 = vpop.xlane.xlu0 %324
        %s326 = scvt.s32.f32 %s323
        %v327 = vstv %s326
        %v328 = vrcp.pop %v327
        %v329 = vmul.f32 %v327, %v328
        %v330 = vsub.f32 1.0, %v329
        %v331 = vmul.f32 %v328, %v330
        %v332 = vadd.f32 %v328, %v331
        %vm333 = vweird.f32 %v327
        %vm334 = vweird.f32 %v328
        %vm335 = vmor %vm333, %vm334
        %v336 = vsel %vm335, %v328, %v332
        %v337 = vand.u32 2147483647, %v327
        %vm338 = vcmp.eq.f32.partialorder %v337, 8.507059e+37
        %v339 = vand.u32 %v327, 2147483648
        %v340 = vor.u32 1.1754944e-38, %v339
        %v341 = vsel %vm338, %v340, %v336
        %v342 = vmul.f32 %v325, %v341
        %v343 = vlaneseq
        %v344 = vand.u32 %v343, 127
        %v345 = vstv %s323
        %vm346 = vcmp.lt.s32.totalorder %v344, %v345
        %v347 = vsub.f32 %v315, %v342
        %v348 = vsel %vm346, 1, 0
        %vm349 = vcmp.eq.s32.totalorder %v348, 1
        %v350 = vsel %vm349, %v347, 0.0
        %v351 = vmul.f32 %v350, %v350
        %352 = vadd.xlane.f32.xlu0 %v351
        %v353 = vpop.xlane.xlu0 %352
        %354 = vst [vmem:[%s227] sm:$0xff] %v325
        %355 = vst [vmem:[%s234] sm:$0xff] %v353
        %s356 = sand.u32 %s93, 1
        %s357 = scalar_lea.sflag [#allocation3], %s356
        %s358 = sand.u32 %s93, 1
        %s359 = smul.addr %s358, 4
        %s360 = scalar_lea.vmem [#allocation2], %s359
        %s361 = sand.u32 %s22, 1
        %s362 = scalar_lea.sflag [#allocation5], %s361
        %s363 = sand.u32 %s121, 1
        %s364 = smul.addr %s363, 8
        %s365 = scalar_lea.vmem [#allocation4], %s364
        %s366 = sand.u32 %s22, 1
        %s367 = scalar_lea.sflag [#allocation5], %s366
        %s368 = sand.u32 %s149, 1
        %s369 = smul.addr %s368, 8
        %s370 = scalar_lea.vmem [#allocation6], %s369
        // Predicated region
        $region29: #{tpu_custom_call.1} parent=27 // pred_check
          %p371 = pneg %p103
        $region30: #{tpu_custom_call.1} parent=27 // pred_check_branch
          %373 = sbr.rel (%p371) target = $region32
        $region31: #{tpu_custom_call.1} parent=27 // pred_region
          %375 = vsyncadd %s357, 0
          %s376 = sadd.s32 %s27, %s26
          %s377 = smul.addr %s376, 4
          %s378 = scalar_lea.hbm %s2, %s377
          %s380 = sshll.u32 %s360, 4
          %s381 = int_to_ptr.vmem [resolvable:$true] %s380
          %s382 = sshll.u32 %s378, 4
          %s383 = int_to_ptr.hbm [resolvable:$true] %s382
          %385 = dma.vmem_to_hbm [thread:$0]  %s381, 64, %s383, %s357
        $region32: #{tpu_custom_call.1} parent=27 // pred_fallthru
          _
        // Predicated region
        $region33: #{tpu_custom_call.1} parent=27 // pred_check
          %p386 = pneg %p131
        $region34: #{tpu_custom_call.1} parent=27 // pred_check_branch
          %388 = sbr.rel (%p386) target = $region36
        $region35: #{tpu_custom_call.1} parent=27 // pred_region
          %390 = vsyncadd %s362, 0
          %s391 = sadd.s32 %s27, %s26
          %s392 = smul.addr %s391, 8
          %s393 = scalar_lea.hbm %s3, %s392
          %s395 = sshll.u32 %s365, 4
          %s396 = int_to_ptr.vmem [resolvable:$true] %s395
          %s397 = sshll.u32 %s393, 4
          %s398 = int_to_ptr.hbm [resolvable:$true] %s397
          %400 = dma.vmem_to_hbm [thread:$0]  %s396, 128, %s398, %s362
        $region36: #{tpu_custom_call.1} parent=27 // pred_fallthru
          _
        // Predicated region
        $region37: #{tpu_custom_call.1} parent=27 // pred_check
          %p401 = pneg %p159
        $region38: #{tpu_custom_call.1} parent=27 // pred_check_branch
          %403 = sbr.rel (%p401) target = $region40
        $region39: #{tpu_custom_call.1} parent=27 // pred_region
          %405 = vsyncadd %s367, 0
          %s406 = sadd.s32 %s27, %s26
          %s407 = smul.addr %s406, 8
          %s408 = scalar_lea.hbm %s4, %s407
          %s410 = sshll.u32 %s370, 4
          %s411 = int_to_ptr.vmem [resolvable:$true] %s410
          %s412 = sshll.u32 %s408, 4
          %s413 = int_to_ptr.hbm [resolvable:$true] %s412
          %415 = dma.vmem_to_hbm [thread:$0]  %s411, 128, %s413, %s367
        $region40: #{tpu_custom_call.1} parent=27 // pred_fallthru
          _
      $region28: #{tpu_custom_call.1} parent=5 // pred_fallthru
        _
      %p416 = scmp.le.s32.totalorder 2, %s17
      // Predicated region
      $region41: #{tpu_custom_call.1} parent=5 // pred_check
        %p417 = pneg %p416
      $region42: #{tpu_custom_call.1} parent=5 // pred_check_branch
        %419 = sbr.rel (%p417) target = $region44
      $region43: #{tpu_custom_call.1} parent=5 // pred_region
        %s420 = ssub.s32 %s17, 2
        // Predicated region
        $region45: #{tpu_custom_call.1} parent=43 // pred_check
          %p421 = pneg %p109
        $region46: #{tpu_custom_call.1} parent=43 // pred_check_branch
          %423 = sbr.rel (%p421) target = $region48
        $region47: #{tpu_custom_call.1} parent=43 // pred_region
          %s424 = sand.u32 %s94, 1
          %s425 = scalar_lea.sflag [#allocation3], %s424
          %s426 = sand.u32 %s94, 1
          %s427 = smul.addr %s426, 4
          %s428 = scalar_lea.vmem [#allocation2], %s427
          %430 = dma.done %s425, 64
        $region48: #{tpu_custom_call.1} parent=43 // pred_fallthru
          _
        // Predicated region
        $region49: #{tpu_custom_call.1} parent=43 // pred_check
          %p431 = pneg %p137
        $region50: #{tpu_custom_call.1} parent=43 // pred_check_branch
          %433 = sbr.rel (%p431) target = $region52
        $region51: #{tpu_custom_call.1} parent=43 // pred_region
          %s434 = sand.u32 %s23, 1
          %s435 = scalar_lea.sflag [#allocation5], %s434
          %s436 = sand.u32 %s122, 1
          %s437 = smul.addr %s436, 8
          %s438 = scalar_lea.vmem [#allocation4], %s437
          %440 = dma.done %s435, 128
        $region52: #{tpu_custom_call.1} parent=43 // pred_fallthru
          _
        // Predicated region
        $region53: #{tpu_custom_call.1} parent=43 // pred_check
          %p441 = pneg %p165
        $region54: #{tpu_custom_call.1} parent=43 // pred_check_branch
          %443 = sbr.rel (%p441) target = $region56
        $region55: #{tpu_custom_call.1} parent=43 // pred_region
          %s444 = sand.u32 %s23, 1
          %s445 = scalar_lea.sflag [#allocation5], %s444
          %s446 = sand.u32 %s150, 1
          %s447 = smul.addr %s446, 8
          %s448 = scalar_lea.vmem [#allocation6], %s447
          %450 = dma.done %s445, 128
        $region56: #{tpu_custom_call.1} parent=43 // pred_fallthru
          _
      $region44: #{tpu_custom_call.1} parent=5 // pred_fallthru
        _
    $region6: #{tpu_custom_call.1} parent=1 // loop_footer
      %s21 = sadd.s32 1, %s17
    $region7: #{tpu_custom_call.1} parent=1 // loop_footer_branch
      %16 = sbr.rel target = $region3
    $region8: #{tpu_custom_call.1} parent=1 // loop_exit
      _
    %451 = vsyncpa [#allocation3], 1
    %s452 = scalar_lea.sflag [#allocation3], 1
    %453 = vsyncpa %s452, 1
    %454 = vsyncpa [#allocation5], 1
    %s455 = scalar_lea.sflag [#allocation5], 1
    %456 = vsyncpa %s455, 1

</llo_original>
